<compile_context>
chip_gen: v5e
topology: v5e:2x2
jax: 0.10.0
libtpu: 0.0.40
codegen_flags: <defaults>
</compile_context>

<pallas_src>
import functools

import jax
import jax.numpy as jnp
from jax.experimental import pallas as pl
from jax.experimental.pallas import tpu as pltpu

LANE = 128
ACC_ROWS = 32   # 4 f32 vregs of independent accumulation; multiple of every
                # sublane pack (8 f32 / 16 bf16 / 32 int8), so br % ACC_ROWS==0
                # also satisfies the (8,128) block constraint for all dtypes.


def _default_num_cores():
    """2 TensorCores per chip only on v7x; v5e/v6e have a single TC."""
    try:
        kind = jax.devices()[0].device_kind.lower()
    except Exception:
        return 1
    return 2 if ("v7" in kind or "tpu7" in kind) else 1


def _quantile_loss_kernel(yp_ref, yt_ref, out_ref, *, quantile, block_rows,
                          valid_rows, need_mask):
    i = pl.program_id(1)                      # reduction ("arbitrary") axis

    @pl.when(i == 0)
    def _init():
        out_ref[...] = jnp.zeros_like(out_ref)

    # Stream native dtype from HBM, upcast on the VPU (hidden under DMA).
    yp = yp_ref[...].astype(jnp.float32)
    yt = yt_ref[...].astype(jnp.float32)
    err = yt - yp
    loss = jnp.maximum((quantile - 1.0) * err, quantile * err)

    def _accumulate(x):
        # Blocked accumulation into the resident output block: 4 independent
        # vreg accumulators (ILP); the single cross-lane reduce happens in the
        # JAX wrapper after the kernel.
        out_ref[...] += x.reshape(-1, ACC_ROWS, LANE).sum(axis=0)

    if need_mask:
        last = pl.num_programs(1) - 1

        @pl.when(i < last)
        def _full_block():
            _accumulate(loss)

        @pl.when(i == last)
        def _ragged_block():
            # Rows past the end of the slab hold unspecified data -> select 0
            # (jnp.where, so NaN-safe).  Only emitted for the last step.
            row_ids = i * block_rows + jax.lax.broadcasted_iota(
                jnp.int32, loss.shape, 0)
            _accumulate(jnp.where(row_ids < valid_rows, loss, 0.0))
    else:
        _accumulate(loss)


def quantile_loss(y_pred, y_true, quantile=0.9, *, block_rows=None,
                  num_cores=None):
    """Pallas implementation of QuantileLoss.forward (returns a scalar)."""
    assert y_pred.shape == y_true.shape
    n_elems = y_pred.size
    out_dtype = jnp.promote_types(y_pred.dtype, y_true.dtype)

    if num_cores is None:
        num_cores = _default_num_cores()

    # Tiny inputs: a kernel launch is pointless.
    if n_elems < LANE:
        e = y_true.astype(jnp.float32) - y_pred.astype(jnp.float32)
        l = jnp.maximum((quantile - 1.0) * e, quantile * e)
        return jnp.mean(l).astype(out_dtype)

    yp = y_pred.reshape(-1)
    yt = y_true.reshape(-1)

    # Pad (zeros -> zero loss contribution) only up to the reshape granularity
    # num_cores*128; a free reshape (no HBM rewrite) in the common aligned case.
    grain = num_cores * LANE
    pad = (-n_elems) % grain
    if pad:
        # TODO(synk): a fully copy-free unaligned path needs 1-D refs or manual
        # element-granularity DMA; this rare path costs one extra HBM pass.
        yp = jnp.pad(yp, (0, pad))
        yt = jnp.pad(yt, (0, pad))

    rows = (n_elems + pad) // grain            # rows per core
    yp = yp.reshape(num_cores, rows, LANE)
    yt = yt.reshape(num_cores, rows, LANE)

    isz_p = y_pred.dtype.itemsize
    isz_t = y_true.dtype.itemsize

    # Dtype-aware default tile: ~2 MiB per input per buffer (>=85% of HBM
    # roofline on measured tiled reductions).
    if block_rows is None:
        block_rows = 8192 if min(isz_p, isz_t) <= 2 else 4096

    # Keep 2 inputs x 2 buffers <= ~24 MiB (safe inside v7x's 64 MiB VMEM and
    # every generation's scoped default once vmem_limit_bytes is raised).
    bytes_per_row = LANE * (isz_p + isz_t)
    max_br_vmem = max(ACC_ROWS,
                      ((24 << 20) // 2 // bytes_per_row) // ACC_ROWS * ACC_ROWS)

    br = min(block_rows, max_br_vmem, pl.cdiv(rows, ACC_ROWS) * ACC_ROWS)
    br = max(ACC_ROWS, (br // ACC_ROWS) * ACC_ROWS)
    nb = pl.cdiv(rows, br)
    need_mask = (rows % br) != 0

    footprint = 2 * br * bytes_per_row + 2 * ACC_ROWS * LANE * 4
    vmem_limit = (32 << 20) if footprint > (12 << 20) else None

    kernel = functools.partial(
        _quantile_loss_kernel,
        quantile=float(quantile),
        block_rows=br,
        valid_rows=rows,
        need_mask=need_mask,
    )

    n_stream = num_cores * rows * LANE
    cost = pl.CostEstimate(
        flops=5 * n_stream,
        transcendentals=0,
        bytes_accessed=n_stream * (isz_p + isz_t)
        + num_cores * ACC_ROWS * LANE * 4,
    )

    cp_kwargs = dict(
        # core-split axis parallel (2x on v7x), reduction axis sequential
        dimension_semantics=("parallel", "arbitrary"),
    )
    if vmem_limit is not None:
        cp_kwargs["vmem_limit_bytes"] = vmem_limit

    in_spec = pl.BlockSpec((None, br, LANE), lambda c, i: (c, i, 0))
    partials = pl.pallas_call(
        kernel,
        out_shape=jax.ShapeDtypeStruct((num_cores, ACC_ROWS, LANE),
                                       jnp.float32),
        grid_spec=pltpu.PrefetchScalarGridSpec(
            num_scalar_prefetch=0,
            grid=(num_cores, nb),
            in_specs=[in_spec, in_spec],
            out_specs=pl.BlockSpec((None, ACC_ROWS, LANE),
                                   lambda c, i: (c, 0, 0)),
        ),
        compiler_params=pltpu.CompilerParams(**cp_kwargs),
        cost_estimate=cost,
    )(yp, yt)

    total = jnp.sum(partials, dtype=jnp.float32)   # cross-lane reduce + cores
    return (total / n_elems).astype(out_dtype)


if __name__ == "__main__":
    # QuantileLoss has no learnable parameters; quantile=0.9 as in __init__.
    quantile = 0.9

    key = jax.random.PRNGKey(0)
    k1, k2 = jax.random.split(key)

    def ref_loss(yp, yt, q):
        e = yt.astype(jnp.float32) - yp.astype(jnp.float32)
        return jnp.mean(jnp.maximum((q - 1.0) * e, q * e))

    # 1) Aligned f32 path (copy-free reshape, single masked block).
    shape = (2, 4, 16, 16)
    y_pred = jax.random.normal(k1, shape, dtype=jnp.float32)
    y_true = jax.random.normal(k2, shape, dtype=jnp.float32)
    loss = jax.block_until_ready(quantile_loss(y_pred, y_true,
                                               quantile=quantile))
    ref = ref_loss(y_pred, y_true, quantile)
    assert jnp.allclose(loss, ref, rtol=1e-5, atol=1e-6), (loss, ref)

    # 2) Unaligned bf16 streaming path (small zero-pad + ragged mask).
    shape2 = (3, 5, 7, 11)
    yp2 = jax.random.normal(k1, shape2, dtype=jnp.bfloat16)
    yt2 = jax.random.normal(k2, shape2, dtype=jnp.bfloat16)
    loss2 = jax.block_until_ready(quantile_loss(yp2, yt2, quantile=quantile))
    ref2 = ref_loss(yp2, yt2, quantile)
    assert jnp.allclose(loss2.astype(jnp.float32), ref2, rtol=1e-2,
                        atol=1e-2), (loss2, ref2)

    # 3) Multi-step reduction with a pl.when-guarded ragged last block.
    shape3 = (2, 3, 16, 128)
    yp3 = jax.random.normal(k1, shape3, dtype=jnp.float32)
    yt3 = jax.random.normal(k2, shape3, dtype=jnp.float32)
    loss3 = jax.block_until_ready(
        quantile_loss(yp3, yt3, quantile=quantile, block_rows=64))
    ref3 = ref_loss(yp3, yt3, quantile)
    assert jnp.allclose(loss3, ref3, rtol=1e-5, atol=1e-6), (loss3, ref3)

    # 4) Larger input: default big tiles, unmasked accumulation path.
    shape4 = (4, 16, 128, 128)
    yp4 = jax.random.normal(k1, shape4, dtype=jnp.float32)
    yt4 = jax.random.normal(k2, shape4, dtype=jnp.float32)
    loss4 = jax.block_until_ready(quantile_loss(yp4, yt4, quantile=quantile))
    ref4 = ref_loss(yp4, yt4, quantile)
    assert jnp.allclose(loss4, ref4, rtol=1e-5, atol=1e-5), (loss4, ref4)

    print("KERNEL_OK")
</pallas_src>

<mosaic_0001>
module attributes {stable_mosaic.version = 11 : i64} {
  func.func @_quantile_loss_kernel(%arg0: i32, %arg1: i32, %arg2: memref<1x32x128xf32, #tpu.memory_space<vmem>>, %arg3: memref<1x32x128xf32, #tpu.memory_space<vmem>>, %arg4: memref<1x32x128xf32, #tpu.memory_space<vmem>>) attributes {dimension_semantics = [#tpu.dimension_semantics<parallel>, #tpu.dimension_semantics<arbitrary>], iteration_bounds = array<i64: 1, 1>, scalar_prefetch = 0 : i64, scratch_operands = 0 : i64, tpu.core_type = #tpu.core_type<tc>, window_params = [{transform_indices = @transform_0, window_bounds = array<i64: 1, 32, 128>}, {transform_indices = @transform_1, window_bounds = array<i64: 1, 32, 128>}, {transform_indices = @transform_2, window_bounds = array<i64: 1, 32, 128>}]} {
    %c0_i32 = arith.constant 0 : i32
    %0 = arith.cmpi eq, %arg1, %c0_i32 : i32
    %1 = arith.extui %0 : i1 to i32
    %c0_i32_0 = arith.constant 0 : i32
    %2 = arith.cmpi ne, %1, %c0_i32_0 : i32
    scf.if %2 {
      %cst_11 = arith.constant 0.000000e+00 : f32
      %19 = vector.broadcast %cst_11 : f32 to vector<32x128xf32>
      %c0_12 = arith.constant 0 : index
      %c0_13 = arith.constant 0 : index
      %c0_14 = arith.constant 0 : index
      %20 = vector.load %arg4[%c0_12, %c0_13, %c0_14] : memref<1x32x128xf32, #tpu.memory_space<vmem>>, vector<1x32x128xf32>
      %21 = vector.shape_cast %20 : vector<1x32x128xf32> to vector<32x128xf32>
      %22 = vector.shape_cast %19 : vector<32x128xf32> to vector<1x32x128xf32>
      tpu.vector_store %arg4[%c0_12, %c0_13, %c0_14], %22 {strides = array<i32>} : memref<1x32x128xf32, #tpu.memory_space<vmem>>, vector<1x32x128xf32>,
    } else {
    }
    %c0 = arith.constant 0 : index
    %c0_1 = arith.constant 0 : index
    %c0_2 = arith.constant 0 : index
    %3 = vector.load %arg2[%c0, %c0_1, %c0_2] : memref<1x32x128xf32, #tpu.memory_space<vmem>>, vector<1x32x128xf32>
    %4 = vector.shape_cast %3 : vector<1x32x128xf32> to vector<32x128xf32>
    %c0_3 = arith.constant 0 : index
    %c0_4 = arith.constant 0 : index
    %c0_5 = arith.constant 0 : index
    %5 = vector.load %arg3[%c0_3, %c0_4, %c0_5] : memref<1x32x128xf32, #tpu.memory_space<vmem>>, vector<1x32x128xf32>
    %6 = vector.shape_cast %5 : vector<1x32x128xf32> to vector<32x128xf32>
    %7 = arith.subf %6, %4 : vector<32x128xf32>
    %cst = arith.constant -1.000000e-01 : f32
    %8 = vector.broadcast %cst : f32 to vector<32x128xf32>
    %9 = arith.mulf %8, %7 : vector<32x128xf32>
    %cst_6 = arith.constant 0.899999976 : f32
    %10 = vector.broadcast %cst_6 : f32 to vector<32x128xf32>
    %11 = arith.mulf %10, %7 : vector<32x128xf32>
    %12 = arith.maximumf %9, %11 : vector<32x128xf32>
    %c0_i32_7 = arith.constant 0 : i32
    %13 = arith.cmpi slt, %arg1, %c0_i32_7 : i32
    %14 = arith.extui %13 : i1 to i32
    %c0_i32_8 = arith.constant 0 : i32
    %15 = arith.cmpi ne, %14, %c0_i32_8 : i32
    scf.if %15 {
      %c0_11 = arith.constant 0 : index
      %c0_12 = arith.constant 0 : index
      %c0_13 = arith.constant 0 : index
      %19 = vector.load %arg4[%c0_11, %c0_12, %c0_13] : memref<1x32x128xf32, #tpu.memory_space<vmem>>, vector<1x32x128xf32>
      %20 = vector.shape_cast %19 : vector<1x32x128xf32> to vector<32x128xf32>
      %21 = vector.shape_cast %12 : vector<32x128xf32> to vector<1x32x128xf32>
      %cst_14 = arith.constant dense<0.000000e+00> : vector<32x128xf32>
      %22 = vector.multi_reduction <add>, %21, %cst_14 [0] : vector<1x32x128xf32> to vector<32x128xf32>
      %23 = arith.addf %20, %22 : vector<32x128xf32>
      %c0_15 = arith.constant 0 : index
      %c0_16 = arith.constant 0 : index
      %c0_17 = arith.constant 0 : index
      %24 = vector.load %arg4[%c0_15, %c0_16, %c0_17] : memref<1x32x128xf32, #tpu.memory_space<vmem>>, vector<1x32x128xf32>
      %25 = vector.shape_cast %24 : vector<1x32x128xf32> to vector<32x128xf32>
      %26 = vector.shape_cast %23 : vector<32x128xf32> to vector<1x32x128xf32>
      tpu.vector_store %arg4[%c0_15, %c0_16, %c0_17], %26 {strides = array<i32>} : memref<1x32x128xf32, #tpu.memory_space<vmem>>, vector<1x32x128xf32>,
    } else {
    }
    %c0_i32_9 = arith.constant 0 : i32
    %16 = arith.cmpi eq, %arg1, %c0_i32_9 : i32
    %17 = arith.extui %16 : i1 to i32
    %c0_i32_10 = arith.constant 0 : i32
    %18 = arith.cmpi ne, %17, %c0_i32_10 : i32
    scf.if %18 {
      %c32_i32 = arith.constant 32 : i32
      %19 = arith.muli %arg1, %c32_i32 : i32
      %20 = tpu.iota {dimensions = array<i32: 0>} : vector<32x128xi32>
      %21 = vector.broadcast %19 : i32 to vector<32x128xi32>
      %22 = arith.addi %21, %20 : vector<32x128xi32>
      %c16_i32 = arith.constant 16 : i32
      %23 = vector.broadcast %c16_i32 : i32 to vector<32x128xi32>
      %24 = arith.cmpi slt, %22, %23 : vector<32x128xi32>
      %cst_11 = arith.constant 0.000000e+00 : f32
      %25 = vector.broadcast %cst_11 : f32 to vector<32x128xf32>
      %26 = arith.select %24, %12, %25 : vector<32x128xi1>, vector<32x128xf32>
      %c0_12 = arith.constant 0 : index
      %c0_13 = arith.constant 0 : index
      %c0_14 = arith.constant 0 : index
      %27 = vector.load %arg4[%c0_12, %c0_13, %c0_14] : memref<1x32x128xf32, #tpu.memory_space<vmem>>, vector<1x32x128xf32>
      %28 = vector.shape_cast %27 : vector<1x32x128xf32> to vector<32x128xf32>
      %29 = vector.shape_cast %26 : vector<32x128xf32> to vector<1x32x128xf32>
      %cst_15 = arith.constant dense<0.000000e+00> : vector<32x128xf32>
      %30 = vector.multi_reduction <add>, %29, %cst_15 [0] : vector<1x32x128xf32> to vector<32x128xf32>
      %31 = arith.addf %28, %30 : vector<32x128xf32>
      %c0_16 = arith.constant 0 : index
      %c0_17 = arith.constant 0 : index
      %c0_18 = arith.constant 0 : index
      %32 = vector.load %arg4[%c0_16, %c0_17, %c0_18] : memref<1x32x128xf32, #tpu.memory_space<vmem>>, vector<1x32x128xf32>
      %33 = vector.shape_cast %32 : vector<1x32x128xf32> to vector<32x128xf32>
      %34 = vector.shape_cast %31 : vector<32x128xf32> to vector<1x32x128xf32>
      tpu.vector_store %arg4[%c0_16, %c0_17, %c0_18], %34 {strides = array<i32>} : memref<1x32x128xf32, #tpu.memory_space<vmem>>, vector<1x32x128xf32>,
    } else {
    }
    return
  }
  func.func @transform_0(%arg0: i32, %arg1: i32) -> (i32, i32, i32) {
    %c0_i32 = arith.constant 0 : i32
    %c0_i32_0 = arith.constant 0 : i32
    return %arg0, %arg1, %c0_i32 : i32, i32, i32
  }
  func.func @transform_1(%arg0: i32, %arg1: i32) -> (i32, i32, i32) {
    %c0_i32 = arith.constant 0 : i32
    %c0_i32_0 = arith.constant 0 : i32
    return %arg0, %arg1, %c0_i32 : i32, i32, i32
  }
  func.func @transform_2(%arg0: i32, %arg1: i32) -> (i32, i32, i32) {
    %c0_i32 = arith.constant 0 : i32
    %c0_i32_0 = arith.constant 0 : i32
    %c0_i32_1 = arith.constant 0 : i32
    return %arg0, %c0_i32, %c0_i32_0 : i32, i32, i32
  }
}

</mosaic_0001>

<llo_original>
// kernel: tpu_custom_call.1
$region0: #{tpu_custom_call.1}
  #allocation0 [shape = 'u32[]', space=smem, size = 0x4, offset = 0x4, fixed_abs, tag = 'smem constant byte address 0x4 - core index']
  #allocation1 [shape = 'u32[72,128]{1,0:T(1,128)}', space=vmem, size = 0x9000, scoped, tag = 'internal scratch']
  %s0 = inlined_call_operand.hbm [shape: f32[1,16,128], index: 0, kind: input, shape index: {}]
  %s1 = inlined_call_operand.hbm [shape: f32[1,16,128], index: 1, kind: input, shape index: {}]
  %s2 = inlined_call_operand.hbm [shape: f32[1,32,128], index: 2, kind: output, shape index: {}]
  %s3 = sld [smem:[#allocation0]]
  $region38: #{tpu_custom_call.1} parent=0
    _
  %s5 = ssub.s32 1, %s3
  %s6 = scalar_select 0, %s5, %s3
  $region1: #{tpu_custom_call.1} parent=0
    #allocation2 [shape = 'u8[16384]{0}', space=vmem, size = 0x4000, scoped, tag = 'input window, operand 0, single buffered']
    #allocation3 [shape = 's32[1]{0}', space=sflag, size = 0x4, scoped, tag = 'scoped memory for tpu_custom_call.1']
    #allocation4 [shape = 's32[1]{0}', space=sflag, size = 0x4, scoped, tag = 'scoped memory for tpu_custom_call.1']
    #allocation5 [shape = 'u8[16384]{0}', space=vmem, size = 0x4000, scoped, tag = 'input window, operand 1, single buffered']
    #allocation6 [shape = 's32[1]{0}', space=sflag, size = 0x4, scoped, tag = 'scoped memory for tpu_custom_call.1']
    #allocation7 [shape = 'u8[16384]{0}', space=vmem, size = 0x4000, scoped, tag = 'output window, operand 0, single buffered']
    %7 = vsyncpa [#allocation3], 0
    %8 = vsyncpa [#allocation6], 0
    %9 = vsyncpa [#allocation4], 0
    // Predicated region
    $region2: #{tpu_custom_call.1} parent=1 // pred_check
      _
    $region3: #{tpu_custom_call.1} parent=1 // pred_check_branch
      %11 = sbr.rel (0) target = $region5
    $region4: #{tpu_custom_call.1} parent=1 // pred_region
      %13 = vsyncadd [#allocation3], 256
      %s14 = sshll.u32 %s0, 4
      %s15 = int_to_ptr.hbm [resolvable:$true] %s14
      %s16 = sshll.u32 [#allocation2], 4
      %s17 = int_to_ptr.vmem [resolvable:$true] %s16
      %22 = dma.hbm_to_vmem [thread:$0]  %s15, 256, %s17, [#allocation3], 128, 128, 8
    $region5: #{tpu_custom_call.1} parent=1 // pred_fallthru
      _
    // Predicated region
    $region6: #{tpu_custom_call.1} parent=1 // pred_check
      _
    $region7: #{tpu_custom_call.1} parent=1 // pred_check_branch
      %24 = sbr.rel (0) target = $region9
    $region8: #{tpu_custom_call.1} parent=1 // pred_region
      %26 = vsyncadd [#allocation6], 256
      %s27 = sshll.u32 %s1, 4
      %s28 = int_to_ptr.hbm [resolvable:$true] %s27
      %s29 = sshll.u32 [#allocation5], 4
      %s30 = int_to_ptr.vmem [resolvable:$true] %s29
      %35 = dma.hbm_to_vmem [thread:$0]  %s28, 256, %s30, [#allocation6], 128, 128, 8
    $region9: #{tpu_custom_call.1} parent=1 // pred_fallthru
      _
    // Predicated region
    $region10: #{tpu_custom_call.1} parent=1 // pred_check
      _
    $region11: #{tpu_custom_call.1} parent=1 // pred_check_branch
      %37 = sbr.rel (0) target = $region13
    $region12: #{tpu_custom_call.1} parent=1 // pred_region
      %39 = dma.done [#allocation3], 512
    $region13: #{tpu_custom_call.1} parent=1 // pred_fallthru
      _
    // Predicated region
    $region14: #{tpu_custom_call.1} parent=1 // pred_check
      _
    $region15: #{tpu_custom_call.1} parent=1 // pred_check_branch
      %41 = sbr.rel (0) target = $region17
    $region16: #{tpu_custom_call.1} parent=1 // pred_region
      %43 = dma.done [#allocation6], 512
    $region17: #{tpu_custom_call.1} parent=1 // pred_fallthru
      _
    %p44 = scmp.eq.s32.totalorder 0, 0
    // Predicated region
    $region18: #{tpu_custom_call.1} parent=1 // pred_check
      %p45 = pneg %p44
    $region19: #{tpu_custom_call.1} parent=1 // pred_check_branch
      %47 = sbr.rel (%p45) target = $region21
    $region20: #{tpu_custom_call.1} parent=1 // pred_region
      %48 = vst [vmem:[#allocation7] sm:$0xff] 0.0
      %49 = vst [vmem:[#allocation7 + $0x8] sm:$0xff] 0.0
      %50 = vst [vmem:[#allocation7 + $0x10] sm:$0xff] 0.0
      %51 = vst [vmem:[#allocation7 + $0x18] sm:$0xff] 0.0
    $region21: #{tpu_custom_call.1} parent=1 // pred_fallthru
      _
    %v52 = vld [vmem:[#allocation2] sm:$0xff]
    %v53 = vld [vmem:[#allocation2 + $0x8] sm:$0xff]
    %v54 = vld [vmem:[#allocation2 + $0x10] sm:$0xff]
    %v55 = vld [vmem:[#allocation2 + $0x18] sm:$0xff]
    %v56 = vld [vmem:[#allocation5] sm:$0xff]
    %v57 = vld [vmem:[#allocation5 + $0x8] sm:$0xff]
    %v58 = vld [vmem:[#allocation5 + $0x10] sm:$0xff]
    %v59 = vld [vmem:[#allocation5 + $0x18] sm:$0xff]
    %v60 = vsub.f32 %v56, %v52
    %v61 = vsub.f32 %v57, %v53
    %v62 = vsub.f32 %v58, %v54
    %v63 = vsub.f32 %v59, %v55
    %v64 = vmul.f32 %v60, -0.1
    %v65 = vmul.f32 %v61, -0.1
    %v66 = vmul.f32 %v62, -0.1
    %v67 = vmul.f32 %v63, -0.1
    %v68 = vmul.f32 %v60, 0.9
    %v69 = vmul.f32 %v61, 0.9
    %v70 = vmul.f32 %v62, 0.9
    %v71 = vmul.f32 %v63, 0.9
    %v72 = vmax.f32 %v64, %v68
    %v73 = vmax.f32 %v65, %v69
    %v74 = vmax.f32 %v66, %v70
    %v75 = vmax.f32 %v67, %v71
    %p76 = scmp.lt.s32.totalorder 0, 0
    // Predicated region
    $region22: #{tpu_custom_call.1} parent=1 // pred_check
      %p77 = pneg %p76
    $region23: #{tpu_custom_call.1} parent=1 // pred_check_branch
      %79 = sbr.rel (%p77) target = $region25
    $region24: #{tpu_custom_call.1} parent=1 // pred_region
      %v80 = vld [vmem:[#allocation7] sm:$0xff]
      %v81 = vld [vmem:[#allocation7 + $0x8] sm:$0xff]
      %v82 = vld [vmem:[#allocation7 + $0x10] sm:$0xff]
      %v83 = vld [vmem:[#allocation7 + $0x18] sm:$0xff]
      %v84 = vadd.f32 %v72, 0.0
      %v85 = vadd.f32 %v73, 0.0
      %v86 = vadd.f32 %v74, 0.0
      %v87 = vadd.f32 %v75, 0.0
      %v88 = vadd.f32 %v80, %v84
      %v89 = vadd.f32 %v81, %v85
      %v90 = vadd.f32 %v82, %v86
      %v91 = vadd.f32 %v83, %v87
      %92 = vst [vmem:[#allocation7] sm:$0xff] %v88
      %93 = vst [vmem:[#allocation7 + $0x8] sm:$0xff] %v89
      %94 = vst [vmem:[#allocation7 + $0x10] sm:$0xff] %v90
      %95 = vst [vmem:[#allocation7 + $0x18] sm:$0xff] %v91
    $region25: #{tpu_custom_call.1} parent=1 // pred_fallthru
      _
    // Predicated region
    $region26: #{tpu_custom_call.1} parent=1 // pred_check
      %p96 = pneg %p44
    $region27: #{tpu_custom_call.1} parent=1 // pred_check_branch
      %98 = sbr.rel (%p96) target = $region29
    $region28: #{tpu_custom_call.1} parent=1 // pred_region
      %s99 = smul.u32 0, 32
      %v100 = vlaneseq
      %v101 = vshrl.u32 %v100, 7
      %v102 = vadd.s32 %v101, 8
      %v103 = vadd.s32 %v101, 16
      %v104 = vadd.s32 %v101, 24
      %v105 = vstv %s99
      %v106 = vadd.s32 %v105, %v101
      %v107 = vadd.s32 %v105, %v102
      %v108 = vadd.s32 %v105, %v103
      %v109 = vadd.s32 %v105, %v104
      %vm110 = vcmp.lt.s32.totalorder %v106, 16
      %vm111 = vcmp.lt.s32.totalorder %v107, 16
      %vm112 = vcmp.lt.s32.totalorder %v108, 16
      %vm113 = vcmp.lt.s32.totalorder %v109, 16
      %v114 = vsel %vm110, %v72, 0.0
      %v115 = vsel %vm111, %v73, 0.0
      %v116 = vsel %vm112, %v74, 0.0
      %v117 = vsel %vm113, %v75, 0.0
      %v118 = vld [vmem:[#allocation7] sm:$0xff]
      %v119 = vld [vmem:[#allocation7 + $0x8] sm:$0xff]
      %v120 = vld [vmem:[#allocation7 + $0x10] sm:$0xff]
      %v121 = vld [vmem:[#allocation7 + $0x18] sm:$0xff]
      %v122 = vadd.f32 %v114, 0.0
      %v123 = vadd.f32 %v115, 0.0
      %v124 = vadd.f32 %v116, 0.0
      %v125 = vadd.f32 %v117, 0.0
      %v126 = vadd.f32 %v118, %v122
      %v127 = vadd.f32 %v119, %v123
      %v128 = vadd.f32 %v120, %v124
      %v129 = vadd.f32 %v121, %v125
      %130 = vst [vmem:[#allocation7] sm:$0xff] %v126
      %131 = vst [vmem:[#allocation7 + $0x8] sm:$0xff] %v127
      %132 = vst [vmem:[#allocation7 + $0x10] sm:$0xff] %v128
      %133 = vst [vmem:[#allocation7 + $0x18] sm:$0xff] %v129
    $region29: #{tpu_custom_call.1} parent=1 // pred_fallthru
      _
    // Predicated region
    $region30: #{tpu_custom_call.1} parent=1 // pred_check
      _
    $region31: #{tpu_custom_call.1} parent=1 // pred_check_branch
      %135 = sbr.rel (0) target = $region33
    $region32: #{tpu_custom_call.1} parent=1 // pred_region
      %137 = vsyncadd [#allocation4], 0
      %s138 = sshll.u32 [#allocation7], 4
      %s139 = int_to_ptr.vmem [resolvable:$true] %s138
      %s140 = sshll.u32 %s2, 4
      %s141 = int_to_ptr.hbm [resolvable:$true] %s140
      %146 = dma.vmem_to_hbm [thread:$0]  %s139, 512, %s141, [#allocation4], 128, 128, 8
    $region33: #{tpu_custom_call.1} parent=1 // pred_fallthru
      _
    // Predicated region
    $region34: #{tpu_custom_call.1} parent=1 // pred_check
      _
    $region35: #{tpu_custom_call.1} parent=1 // pred_check_branch
      %148 = sbr.rel (0) target = $region37
    $region36: #{tpu_custom_call.1} parent=1 // pred_region
      %150 = dma.done [#allocation4], 512
    $region37: #{tpu_custom_call.1} parent=1 // pred_fallthru
      _
    %151 = vsyncpa [#allocation3], 1
    %152 = vsyncpa [#allocation6], 1
    %153 = vsyncpa [#allocation4], 1

</llo_original>
